<compile_context>
chip_gen: v5e
topology: v5e:2x2
jax: 0.10.0
libtpu: 0.0.40
codegen_flags: <defaults>
</compile_context>

<pallas_src>
import jax
import jax.numpy as jnp
from jax.experimental import pallas as pl
from jax.experimental.pallas import tpu as pltpu

IN_DIM, HID, OUT_DIM, OUT_PAD = 784, 256, 10, 128
MIN_TILE = 16  # bf16 packs 16 rows per sublane group; keep row tiles multiples of 16


def _round_up(n, m):
    return ((n + m - 1) // m) * m


def mlp_kernel(x_ref, w1_ref, b1_ref, w2_ref, b2_ref, o_ref):
    # x_ref:  (bm, 784)  bf16    w1_ref: (784, 256) bf16   b1_ref: (1, 256) f32
    # w2_ref: (256, 128) bf16    b2_ref: (1, 128)   f32    o_ref:  (bm, 128) f32
    # Note: IN_DIM=784 is not a multiple of 128; per review we do NOT pad K
    # (only matters while v5e is f32-compute-bound, which bf16 removes).
    h = jnp.dot(x_ref[...], w1_ref[...], preferred_element_type=jnp.float32)
    h = jnp.maximum(h + b1_ref[...], 0.0)          # bias + ReLU in f32 on the VPU
    out = jnp.dot(h.astype(jnp.bfloat16), w2_ref[...],
                  preferred_element_type=jnp.float32)
    o_ref[...] = out + b2_ref[...]


def mlp_forward(x_img, w1, b1, w2, b2, *, bm=4096, return_padded=False):
    """x_img: (B, 1, 28, 28) -> logits (B, 10) f32 (or (B, 128) if return_padded)."""
    B = x_img.shape[0]
    if B == 0:  # degenerate batch guard
        return jnp.zeros((0, OUT_PAD if return_padded else OUT_DIM), jnp.float32)

    # bf16 streams; biases stay f32 (epilogue is f32).
    x = x_img.reshape(B, IN_DIM).astype(jnp.bfloat16)   # == torch x.view(-1, 784)
    w1_b = w1.astype(jnp.bfloat16)
    # Lane-dense second layer: pad N from 10 -> 128 with exact zeros.
    w2_p = jnp.zeros((HID, OUT_PAD), jnp.bfloat16).at[:, :OUT_DIM].set(
        w2.astype(jnp.bfloat16))
    b2_p = jnp.zeros((1, OUT_PAD), jnp.float32).at[0, :OUT_DIM].set(
        b2.astype(jnp.float32))
    b1_2d = b1.astype(jnp.float32).reshape(1, HID)

    # Batch tile: large by default, clamped to the batch; guarantee >= 2 grid
    # steps when possible so v7x's two TensorCores both get a share.
    bm_eff = min(bm, _round_up(B, MIN_TILE))
    if B >= 2 * MIN_TILE:
        bm_eff = min(bm_eff, _round_up(pl.cdiv(B, 2), MIN_TILE))
    bm_eff = max(MIN_TILE, _round_up(bm_eff, MIN_TILE))

    grid = (pl.cdiv(B, bm_eff),)   # no jnp.pad of x: partial last tile is masked

    out_padded = pl.pallas_call(
        mlp_kernel,
        out_shape=jax.ShapeDtypeStruct((B, OUT_PAD), jnp.float32),
        grid_spec=pl.GridSpec(
            grid=grid,
            in_specs=[
                pl.BlockSpec((bm_eff, IN_DIM), lambda i: (i, 0)),   # x (streamed)
                # Constant index_maps -> DMA'd once, VMEM-resident across steps.
                # TODO(synk): pipeline_mode=pl.Buffered(1) on these would reclaim
                # their double buffers (~0.5 MiB); skipped — VMEM has ample headroom.
                pl.BlockSpec((IN_DIM, HID), lambda i: (0, 0)),      # w1
                pl.BlockSpec((1, HID), lambda i: (0, 0)),           # b1
                pl.BlockSpec((HID, OUT_PAD), lambda i: (0, 0)),     # w2 (padded)
                pl.BlockSpec((1, OUT_PAD), lambda i: (0, 0)),       # b2 (padded)
            ],
            out_specs=pl.BlockSpec((bm_eff, OUT_PAD), lambda i: (i, 0)),
        ),
        compiler_params=pltpu.CompilerParams(
            dimension_semantics=("parallel",),
            # bm=4096 bf16 needs ~18 MiB of buffers: above v5e's 16 MiB scoped
            # default, comfortably below v7x's 64 MiB physical VMEM.
            vmem_limit_bytes=40 * 1024 * 1024,
        ),
    )(x, w1_b, b1_2d, w2_p, b2_p)

    if return_padded:
        return out_padded            # columns 10..127 are exactly zero
    # Lane slice 128 -> 10; when this feeds another op, prefer return_padded=True
    # and fuse the slice into the consumer to avoid the extra HBM round trip.
    return out_padded[:, :OUT_DIM]


def init_params(key):
    """Deterministic init matching nn.Linear shapes (torch-default-style uniform)."""
    k1, k2, k3, k4 = jax.random.split(key, 4)
    bound1 = 1.0 / (IN_DIM ** 0.5)
    bound2 = 1.0 / (HID ** 0.5)
    # stored as (in_features, out_features) so the kernel does x @ w (== x @ W.T in torch)
    w1 = jax.random.uniform(k1, (IN_DIM, HID), jnp.float32, -bound1, bound1)
    b1 = jax.random.uniform(k2, (HID,), jnp.float32, -bound1, bound1)
    w2 = jax.random.uniform(k3, (HID, OUT_DIM), jnp.float32, -bound2, bound2)
    b2 = jax.random.uniform(k4, (OUT_DIM,), jnp.float32, -bound2, bound2)
    return w1, b1, w2, b2


if __name__ == "__main__":
    key = jax.random.PRNGKey(0)
    k_x, k_p = jax.random.split(key)
    w1, b1, w2, b2 = init_params(k_p)

    def ref_forward(x_img):
        # Plain-JAX reference with the same bf16 operand / f32 accumulate recipe.
        # (For strict torch-f32 parity, drop the bf16 casts and use
        #  precision=jax.lax.Precision.HIGHEST on both dots.)
        xb = x_img.reshape(-1, IN_DIM).astype(jnp.bfloat16)
        h = jnp.dot(xb, w1.astype(jnp.bfloat16),
                    preferred_element_type=jnp.float32) + b1
        h = jnp.maximum(h, 0.0)
        return jnp.dot(h.astype(jnp.bfloat16), w2.astype(jnp.bfloat16),
                       preferred_element_type=jnp.float32) + b2

    # Smoke test 1: B=32 -> two grid steps of 16 rows each.
    x = jax.random.normal(k_x, (32, 1, 28, 28), dtype=jnp.float32)
    logits = jax.block_until_ready(mlp_forward(x, w1, b1, w2, b2))
    assert logits.shape == (32, OUT_DIM)
    assert jnp.allclose(logits, ref_forward(x), atol=5e-2, rtol=5e-2), "mismatch (B=32)"

    # Smoke test 2: ragged B=10 exercises the masked partial tile (no jnp.pad of x).
    x10 = jax.random.normal(k_x, (10, 1, 28, 28), dtype=jnp.float32)
    logits10 = jax.block_until_ready(mlp_forward(x10, w1, b1, w2, b2))
    assert logits10.shape == (10, OUT_DIM)
    assert jnp.allclose(logits10, ref_forward(x10), atol=5e-2, rtol=5e-2), "mismatch (B=10)"

    print("KERNEL_OK")
</pallas_src>

<mosaic_0001>
module attributes {stable_mosaic.version = 11 : i64} {
  func.func @mlp_kernel(%arg0: i32, %arg1: memref<16x784xbf16, #tpu.memory_space<vmem>>, %arg2: memref<784x256xbf16, #tpu.memory_space<vmem>>, %arg3: memref<1x256xf32, #tpu.memory_space<vmem>>, %arg4: memref<256x128xbf16, #tpu.memory_space<vmem>>, %arg5: memref<1x128xf32, #tpu.memory_space<vmem>>, %arg6: memref<16x128xf32, #tpu.memory_space<vmem>>) attributes {dimension_semantics = [#tpu.dimension_semantics<parallel>], iteration_bounds = array<i64: 2>, scalar_prefetch = 0 : i64, scratch_operands = 0 : i64, tpu.core_type = #tpu.core_type<tc>, window_params = [{transform_indices = @transform_0, window_bounds = array<i64: 16, 784>}, {pipeline_mode = #tpu.pipeline_mode<synchronous>, transform_indices = @transform_1, window_bounds = array<i64: 784, 256>}, {pipeline_mode = #tpu.pipeline_mode<synchronous>, transform_indices = @transform_2, window_bounds = array<i64: 1, 256>}, {pipeline_mode = #tpu.pipeline_mode<synchronous>, transform_indices = @transform_3, window_bounds = array<i64: 256, 128>}, {pipeline_mode = #tpu.pipeline_mode<synchronous>, transform_indices = @transform_4, window_bounds = array<i64: 1, 128>}, {transform_indices = @transform_5, window_bounds = array<i64: 16, 128>}]} {
    %c0 = arith.constant 0 : index
    %c0_0 = arith.constant 0 : index
    %0 = vector.load %arg1[%c0, %c0_0] : memref<16x784xbf16, #tpu.memory_space<vmem>>, vector<16x784xbf16>
    %c0_1 = arith.constant 0 : index
    %c0_2 = arith.constant 0 : index
    %1 = vector.load %arg2[%c0_1, %c0_2] : memref<784x256xbf16, #tpu.memory_space<vmem>>, vector<784x256xbf16>
    %cst = arith.constant dense<0.000000e+00> : vector<16x256xf32>
    %2 = tpu.matmul %0, %1, %cst {dimension_numbers = #tpu.dot_dimension_numbers<[1], [0], [0], [1], [0, 0, 1, 1], [], []>} : vector<16x784xbf16>, vector<784x256xbf16>, vector<16x256xf32> -> vector<16x256xf32>
    %c0_3 = arith.constant 0 : index
    %c0_4 = arith.constant 0 : index
    %3 = vector.load %arg3[%c0_3, %c0_4] : memref<1x256xf32, #tpu.memory_space<vmem>>, vector<1x256xf32>
    %4 = vector.broadcast %3 : vector<1x256xf32> to vector<16x256xf32>
    %5 = arith.addf %2, %4 : vector<16x256xf32>
    %cst_5 = arith.constant 0.000000e+00 : f32
    %6 = vector.broadcast %cst_5 : f32 to vector<16x256xf32>
    %7 = arith.maximumf %5, %6 : vector<16x256xf32>
    %8 = arith.truncf %7 : vector<16x256xf32> to vector<16x256xbf16>
    %c0_6 = arith.constant 0 : index
    %c0_7 = arith.constant 0 : index
    %9 = vector.load %arg4[%c0_6, %c0_7] : memref<256x128xbf16, #tpu.memory_space<vmem>>, vector<256x128xbf16>
    %cst_8 = arith.constant dense<0.000000e+00> : vector<16x128xf32>
    %10 = tpu.matmul %8, %9, %cst_8 {dimension_numbers = #tpu.dot_dimension_numbers<[1], [0], [0], [1], [0, 0, 1, 1], [], []>} : vector<16x256xbf16>, vector<256x128xbf16>, vector<16x128xf32> -> vector<16x128xf32>
    %c0_9 = arith.constant 0 : index
    %c0_10 = arith.constant 0 : index
    %11 = vector.load %arg5[%c0_9, %c0_10] : memref<1x128xf32, #tpu.memory_space<vmem>>, vector<1x128xf32>
    %12 = vector.broadcast %11 : vector<1x128xf32> to vector<16x128xf32>
    %13 = arith.addf %10, %12 : vector<16x128xf32>
    %c0_11 = arith.constant 0 : index
    %c0_12 = arith.constant 0 : index
    %14 = vector.load %arg6[%c0_11, %c0_12] : memref<16x128xf32, #tpu.memory_space<vmem>>, vector<16x128xf32>
    tpu.vector_store %arg6[%c0_11, %c0_12], %13 {strides = array<i32>} : memref<16x128xf32, #tpu.memory_space<vmem>>, vector<16x128xf32>,
    return
  }
  func.func @transform_0(%arg0: i32) -> (i32, i32) {
    %c0_i32 = arith.constant 0 : i32
    %c0_i32_0 = arith.constant 0 : i32
    return %arg0, %c0_i32 : i32, i32
  }
  func.func @transform_1(%arg0: i32) -> (i32, i32) {
    %c0_i32 = arith.constant 0 : i32
    %c0_i32_0 = arith.constant 0 : i32
    %c0_i32_1 = arith.constant 0 : i32
    return %c0_i32, %c0_i32_0 : i32, i32
  }
  func.func @transform_2(%arg0: i32) -> (i32, i32) {
    %c0_i32 = arith.constant 0 : i32
    %c0_i32_0 = arith.constant 0 : i32
    %c0_i32_1 = arith.constant 0 : i32
    return %c0_i32, %c0_i32_0 : i32, i32
  }
  func.func @transform_3(%arg0: i32) -> (i32, i32) {
    %c0_i32 = arith.constant 0 : i32
    %c0_i32_0 = arith.constant 0 : i32
    %c0_i32_1 = arith.constant 0 : i32
    return %c0_i32, %c0_i32_0 : i32, i32
  }
  func.func @transform_4(%arg0: i32) -> (i32, i32) {
    %c0_i32 = arith.constant 0 : i32
    %c0_i32_0 = arith.constant 0 : i32
    %c0_i32_1 = arith.constant 0 : i32
    return %c0_i32, %c0_i32_0 : i32, i32
  }
  func.func @transform_5(%arg0: i32) -> (i32, i32) {
    %c0_i32 = arith.constant 0 : i32
    %c0_i32_0 = arith.constant 0 : i32
    return %arg0, %c0_i32 : i32, i32
  }
}

</mosaic_0001>

<llo_original>
// kernel: tpu_custom_call.1
$region0: #{tpu_custom_call.1}
  #allocation0 [shape = 'u32[]', space=smem, size = 0x4, offset = 0x4, fixed_abs, tag = 'smem constant byte address 0x4 - core index']
  #allocation1 [shape = 'u32[72,128]{1,0:T(1,128)}', space=vmem, size = 0x9000, scoped, tag = 'internal scratch']
  %s0 = inlined_call_operand.hbm [shape: bf16[32,784], index: 0, kind: input, shape index: {}]
  %s1 = inlined_call_operand.hbm [shape: bf16[784,256], index: 1, kind: input, shape index: {}]
  %s2 = inlined_call_operand.hbm [shape: f32[1,256], index: 2, kind: input, shape index: {}]
  %s3 = inlined_call_operand.hbm [shape: bf16[256,128], index: 3, kind: input, shape index: {}]
  %s4 = inlined_call_operand.vmem [shape: f32[1,128], index: 4, kind: input, shape index: {}]
  %s5 = inlined_call_operand.hbm [shape: f32[32,128], index: 5, kind: output, shape index: {}]
  %s6 = sld [smem:[#allocation0]]
  $region69: #{tpu_custom_call.1} parent=0
    _
  %s8 = ssub.s32 1, %s6
  %s9 = scalar_select 0, %s8, %s6
  $region1: #{tpu_custom_call.1} parent=0
    #allocation2 [shape = 'u8[57344]{0}', space=vmem, size = 0xe000, scoped, tag = 'input window, operand 0']
    #allocation3 [shape = 's32[2]{0}', space=sflag, size = 0x8, scoped, tag = 'scoped memory for tpu_custom_call.1']
    #allocation4 [shape = 's32[2]{0}', space=sflag, size = 0x8, scoped, tag = 'scoped memory for tpu_custom_call.1']
    #allocation5 [shape = 'u8[401408]{0}', space=vmem, size = 0x62000, scoped, tag = 'input window, operand 1, single buffered']
    #allocation6 [shape = 's32[1]{0}', space=sflag, size = 0x4, scoped, tag = 'scoped memory for tpu_custom_call.1']
    #allocation7 [shape = 'u8[1024]{0}', space=vmem, size = 0x400, scoped, tag = 'input window, operand 2, single buffered']
    #allocation8 [shape = 'u8[65536]{0}', space=vmem, size = 0x10000, scoped, tag = 'input window, operand 3, single buffered']
    #allocation9 [shape = 's32[1]{0}', space=sflag, size = 0x4, scoped, tag = 'scoped memory for tpu_custom_call.1']
    #allocation10 [shape = 'u8[16384]{0}', space=vmem, size = 0x4000, scoped, tag = 'output window, operand 0']
    %10 = vsyncpa [#allocation3], 0
    %s11 = scalar_lea.sflag [#allocation3], 1
    %12 = vsyncpa %s11, 0
    %13 = vsyncpa [#allocation6], 0
    %14 = vsyncpa [#allocation9], 0
    %15 = vsyncpa [#allocation4], 0
    %s16 = scalar_lea.sflag [#allocation4], 1
    %17 = vsyncpa %s16, 0
    loop: start=0, step=1, limit=4
    $region2: #{tpu_custom_call.1} parent=1 // loop_pre_header
      _
    $region3: #{tpu_custom_call.1} parent=1 // loop_header
      %s19 = sphi 0, %s23
      %p20 = scmp.ge.s32.totalorder %s19, 4
      %s29 = sphi 0, %s31
      %s32 = sphi 0, %s29
      %s33 = sphi 0, %s32
      %s49 = sphi 0, %s33
      %s53 = sphi 0, %s53
      %s55 = sphi 0, %s53
      %s56 = sphi 0, %s55
      %s70 = sphi 0, %s56
      %s74 = sphi 0, %s74
      %s76 = sphi 0, %s74
      %s77 = sphi 0, %s76
      %s91 = sphi 0, %s77
      %s95 = sphi 0, %s95
      %s97 = sphi 0, %s95
      %s98 = sphi 0, %s97
      %s112 = sphi 0, %s98
      %s116 = sphi 0, %s116
      %s118 = sphi 0, %s116
      %s119 = sphi 0, %s118
      %s133 = sphi 0, %s119
      %s139 = sphi 0, %s141
      %s142 = sphi 0, %s139
      %s143 = sphi 0, %s142
      %s159 = sphi 0, %s143
    $region4: #{tpu_custom_call.1} parent=1 // loop_header_branch
      %22 = sbr.rel (%p20) target = $region8
    $region5: #{tpu_custom_call.1} parent=1 // loop_body
      %s24 = ssub.s32 %s19, 1
      %s25 = ssub.s32 %s19, 2
      %s26 = sadd.s32 %s19, 1
      %s27 = ssub.s32 %s19, %s26
      %p28 = scmp.eq.s32.totalorder %s27, 0
      %s30 = sadd.s32 %s29, 1
      %s31 = scalar_select %p28, %s29, %s30
      %p34 = pneg %p28
      %p35 = scmp.eq.s32.totalorder %s19, 1
      %p36 = por %p34, %p35
      %p37 = scmp.ne.s32.totalorder %s29, %s32
      %p38 = scmp.eq.s32.totalorder %s19, 0
      %p39 = por %p37, %p38
      %p40 = scmp.ne.s32.totalorder %s29, %s32
      %p41 = scmp.eq.s32.totalorder %s24, 1
      %p42 = por %p40, %p41
      %p43 = scmp.ne.s32.totalorder %s32, %s33
      %p44 = scmp.eq.s32.totalorder %s24, 0
      %p45 = por %p43, %p44
      %p46 = scmp.ne.s32.totalorder %s32, %s33
      %p47 = scmp.eq.s32.totalorder %s25, 1
      %p48 = por %p46, %p47
      %p50 = scmp.ne.s32.totalorder %s33, %s49
      %p51 = scmp.eq.s32.totalorder %s25, 0
      %p52 = por %p50, %p51
      %s54 = sadd.s32 %s53, 1
      %p57 = scmp.eq.s32.totalorder %s19, 1
      %p58 = scmp.ne.s32.totalorder %s53, %s55
      %p59 = scmp.eq.s32.totalorder %s19, 0
      %p60 = por %p58, %p59
      %p61 = scmp.ne.s32.totalorder %s53, %s55
      %p62 = scmp.eq.s32.totalorder %s24, 1
      %p63 = por %p61, %p62
      %p64 = scmp.ne.s32.totalorder %s55, %s56
      %p65 = scmp.eq.s32.totalorder %s24, 0
      %p66 = por %p64, %p65
      %p67 = scmp.ne.s32.totalorder %s55, %s56
      %p68 = scmp.eq.s32.totalorder %s25, 1
      %p69 = por %p67, %p68
      %p71 = scmp.ne.s32.totalorder %s56, %s70
      %p72 = scmp.eq.s32.totalorder %s25, 0
      %p73 = por %p71, %p72
      %s75 = sadd.s32 %s74, 1
      %p78 = scmp.eq.s32.totalorder %s19, 1
      %p79 = scmp.ne.s32.totalorder %s74, %s76
      %p80 = scmp.eq.s32.totalorder %s19, 0
      %p81 = por %p79, %p80
      %p82 = scmp.ne.s32.totalorder %s74, %s76
      %p83 = scmp.eq.s32.totalorder %s24, 1
      %p84 = por %p82, %p83
      %p85 = scmp.ne.s32.totalorder %s76, %s77
      %p86 = scmp.eq.s32.totalorder %s24, 0
      %p87 = por %p85, %p86
      %p88 = scmp.ne.s32.totalorder %s76, %s77
      %p89 = scmp.eq.s32.totalorder %s25, 1
      %p90 = por %p88, %p89
      %p92 = scmp.ne.s32.totalorder %s77, %s91
      %p93 = scmp.eq.s32.totalorder %s25, 0
      %p94 = por %p92, %p93
      %s96 = sadd.s32 %s95, 1
      %p99 = scmp.eq.s32.totalorder %s19, 1
      %p100 = scmp.ne.s32.totalorder %s95, %s97
      %p101 = scmp.eq.s32.totalorder %s19, 0
      %p102 = por %p100, %p101
      %p103 = scmp.ne.s32.totalorder %s95, %s97
      %p104 = scmp.eq.s32.totalorder %s24, 1
      %p105 = por %p103, %p104
      %p106 = scmp.ne.s32.totalorder %s97, %s98
      %p107 = scmp.eq.s32.totalorder %s24, 0
      %p108 = por %p106, %p107
      %p109 = scmp.ne.s32.totalorder %s97, %s98
      %p110 = scmp.eq.s32.totalorder %s25, 1
      %p111 = por %p109, %p110
      %p113 = scmp.ne.s32.totalorder %s98, %s112
      %p114 = scmp.eq.s32.totalorder %s25, 0
      %p115 = por %p113, %p114
      %s117 = sadd.s32 %s116, 1
      %p120 = scmp.eq.s32.totalorder %s19, 1
      %p121 = scmp.ne.s32.totalorder %s116, %s118
      %p122 = scmp.eq.s32.totalorder %s19, 0
      %p123 = por %p121, %p122
      %p124 = scmp.ne.s32.totalorder %s116, %s118
      %p125 = scmp.eq.s32.totalorder %s24, 1
      %p126 = por %p124, %p125
      %p127 = scmp.ne.s32.totalorder %s118, %s119
      %p128 = scmp.eq.s32.totalorder %s24, 0
      %p129 = por %p127, %p128
      %p130 = scmp.ne.s32.totalorder %s118, %s119
      %p131 = scmp.eq.s32.totalorder %s25, 1
      %p132 = por %p130, %p131
      %p134 = scmp.ne.s32.totalorder %s119, %s133
      %p135 = scmp.eq.s32.totalorder %s25, 0
      %p136 = por %p134, %p135
      %s137 = ssub.s32 %s19, %s26
      %p138 = scmp.eq.s32.totalorder %s137, 0
      %s140 = sadd.s32 %s139, 1
      %s141 = scalar_select %p138, %s139, %s140
      %p144 = pneg %p138
      %p145 = scmp.eq.s32.totalorder %s19, 1
      %p146 = por %p144, %p145
      %p147 = scmp.ne.s32.totalorder %s139, %s142
      %p148 = scmp.eq.s32.totalorder %s19, 0
      %p149 = por %p147, %p148
      %p150 = scmp.ne.s32.totalorder %s139, %s142
      %p151 = scmp.eq.s32.totalorder %s24, 1
      %p152 = por %p150, %p151
      %p153 = scmp.ne.s32.totalorder %s142, %s143
      %p154 = scmp.eq.s32.totalorder %s24, 0
      %p155 = por %p153, %p154
      %p156 = scmp.ne.s32.totalorder %s142, %s143
      %p157 = scmp.eq.s32.totalorder %s25, 1
      %p158 = por %p156, %p157
      %p160 = scmp.ne.s32.totalorder %s143, %s159
      %p161 = scmp.eq.s32.totalorder %s25, 0
      %p162 = por %p160, %p161
      %p163 = scmp.le.s32.totalorder 1, %s19
      %p164 = scmp.lt.s32.totalorder %s19, 3
      %p165 = pnand %p163, %p164
      %p166 = pneg %p165
      // Predicated region
      $region9: #{tpu_custom_call.1} parent=5 // pred_check
        _
      $region10: #{tpu_custom_call.1} parent=5 // pred_check_branch
        %168 = sbr.rel (%p165) target = $region12
      $region11: #{tpu_custom_call.1} parent=5 // pred_region
        %s169 = ssub.s32 %s19, 1
        // Predicated region
        $region13: #{tpu_custom_call.1} parent=11 // pred_check
          %p170 = pneg %p66
        $region14: #{tpu_custom_call.1} parent=11 // pred_check_branch
          %172 = sbr.rel (%p170) target = $region16
        $region15: #{tpu_custom_call.1} parent=11 // pred_region
          %174 = vsyncadd [#allocation6], 0
          %s175 = sshll.u32 %s1, 4
          %s176 = int_to_ptr.hbm [resolvable:$true] %s175
          %s177 = sshll.u32 [#allocation5], 4
          %s178 = int_to_ptr.vmem [resolvable:$true] %s177
          %183 = dma.hbm_to_vmem [thread:$0]  %s176, 12544, %s178, [#allocation6], 128, 128, 8
        $region16: #{tpu_custom_call.1} parent=11 // pred_fallthru
          _
        // Predicated region
        $region17: #{tpu_custom_call.1} parent=11 // pred_check
          %p184 = pneg %p87
        $region18: #{tpu_custom_call.1} parent=11 // pred_check_branch
          %186 = sbr.rel (%p184) target = $region20
        $region19: #{tpu_custom_call.1} parent=11 // pred_region
          %188 = vsyncadd [#allocation6], 0
          %s190 = sshll.u32 %s2, 4
          %s191 = int_to_ptr.hbm [resolvable:$true] %s190
          %s192 = sshll.u32 [#allocation7], 4
          %s193 = int_to_ptr.vmem [resolvable:$true] %s192
          %195 = dma.hbm_to_vmem [thread:$0]  %s191, 32, %s193, [#allocation6]
        $region20: #{tpu_custom_call.1} parent=11 // pred_fallthru
          _
        // Predicated region
        $region21: #{tpu_custom_call.1} parent=11 // pred_check
          %p196 = pneg %p108
        $region22: #{tpu_custom_call.1} parent=11 // pred_check_branch
          %198 = sbr.rel (%p196) target = $region24
        $region23: #{tpu_custom_call.1} parent=11 // pred_region
          %200 = vsyncadd [#allocation9], 0
          %s201 = sshll.u32 %s3, 4
          %s202 = int_to_ptr.hbm [resolvable:$true] %s201
          %s203 = sshll.u32 [#allocation8], 4
          %s204 = int_to_ptr.vmem [resolvable:$true] %s203
          %209 = dma.hbm_to_vmem [thread:$0]  %s202, 2048, %s204, [#allocation9], 64, 64, 4
        $region24: #{tpu_custom_call.1} parent=11 // pred_fallthru
          _
        // Predicated region
        $region25: #{tpu_custom_call.1} parent=11 // pred_check
          %p210 = pneg %p129
        $region26: #{tpu_custom_call.1} parent=11 // pred_check_branch
          %212 = sbr.rel (%p210) target = $region28
        $region27: #{tpu_custom_call.1} parent=11 // pred_region
          _
        $region28: #{tpu_custom_call.1} parent=11 // pred_fallthru
          _
      $region12: #{tpu_custom_call.1} parent=5 // pred_fallthru
        _
      %p213 = scmp.lt.s32.totalorder %s19, 2
      // Predicated region
      $region29: #{tpu_custom_call.1} parent=5 // pred_check
        %p214 = pneg %p213
      $region30: #{tpu_custom_call.1} parent=5 // pred_check_branch
        %216 = sbr.rel (%p214) target = $region32
      $region31: #{tpu_custom_call.1} parent=5 // pred_region
        // Predicated region
        $region33: #{tpu_custom_call.1} parent=31 // pred_check
          %p217 = pneg %p39
        $region34: #{tpu_custom_call.1} parent=31 // pred_check_branch
          %219 = sbr.rel (%p217) target = $region36
        $region35: #{tpu_custom_call.1} parent=31 // pred_region
          %s220 = sand.u32 %s29, 1
          %s221 = scalar_lea.sflag [#allocation3], %s220
          %s222 = sand.u32 %s29, 1
          %s223 = smul.addr %s222, 56
          %s224 = scalar_lea.vmem [#allocation2], %s223
          %s225 = smul.u32 2, %s19
          %227 = vsyncadd %s221, 0
          %s228 = smul.addr %s225, 7
          %s229 = smul.addr %s228, 4
          %s230 = scalar_lea.hbm %s0, %s229
          %s231 = sshll.u32 %s230, 4
          %s232 = int_to_ptr.hbm [resolvable:$true] %s231
          %s233 = sshll.u32 %s224, 4
          %s234 = int_to_ptr.vmem [resolvable:$true] %s233
          %239 = dma.hbm_to_vmem [thread:$0]  %s232, 896, %s234, %s221, 448, 448, 28
        $region36: #{tpu_custom_call.1} parent=31 // pred_fallthru
          _
      $region32: #{tpu_custom_call.1} parent=5 // pred_fallthru
        _
      %p240 = scmp.le.s32.totalorder 1, %s19
      %p241 = scmp.lt.s32.totalorder %s19, 3
      %p242 = pnand %p240, %p241
      %p243 = pneg %p242
      // Predicated region
      $region37: #{tpu_custom_call.1} parent=5 // pred_check
        _
      $region38: #{tpu_custom_call.1} parent=5 // pred_check_branch
        %245 = sbr.rel (%p242) target = $region40
      $region39: #{tpu_custom_call.1} parent=5 // pred_region
        %s246 = ssub.s32 %s19, 1
        %s247 = sand.u32 %s32, 1
        %s248 = scalar_lea.sflag [#allocation3], %s247
        %s249 = sand.u32 %s32, 1
        %s250 = smul.addr %s249, 56
        %s251 = scalar_lea.vmem [#allocation2], %s250
        // Predicated region
        $region41: #{tpu_custom_call.1} parent=39 // pred_check
          %p252 = pneg %p45
        $region42: #{tpu_custom_call.1} parent=39 // pred_check_branch
          %254 = sbr.rel (%p252) target = $region44
        $region43: #{tpu_custom_call.1} parent=39 // pred_region
          %256 = dma.done %s248, 896
        $region44: #{tpu_custom_call.1} parent=39 // pred_fallthru
          _
        // Predicated region
        $region45: #{tpu_custom_call.1} parent=39 // pred_check
          %p257 = pneg %p66
        $region46: #{tpu_custom_call.1} parent=39 // pred_check_branch
          %259 = sbr.rel (%p257) target = $region48
        $region47: #{tpu_custom_call.1} parent=39 // pred_region
          %261 = dma.done [#allocation6], 12544
        $region48: #{tpu_custom_call.1} parent=39 // pred_fallthru
          _
        // Predicated region
        $region49: #{tpu_custom_call.1} parent=39 // pred_check
          %p262 = pneg %p87
        $region50: #{tpu_custom_call.1} parent=39 // pred_check_branch
          %264 = sbr.rel (%p262) target = $region52
        $region51: #{tpu_custom_call.1} parent=39 // pred_region
          %266 = dma.done [#allocation6], 32
        $region52: #{tpu_custom_call.1} parent=39 // pred_fallthru
          _
        // Predicated region
        $region53: #{tpu_custom_call.1} parent=39 // pred_check
          %p267 = pneg %p108
        $region54: #{tpu_custom_call.1} parent=39 // pred_check_branch
          %269 = sbr.rel (%p267) target = $region56
        $region55: #{tpu_custom_call.1} parent=39 // pred_region
          %271 = dma.done [#allocation9], 2048
        $region56: #{tpu_custom_call.1} parent=39 // pred_fallthru
          _
        %s272 = sand.u32 %s32, 1
        %s273 = scalar_lea.sflag [#allocation3], %s272
        %s274 = sand.u32 %s32, 1
        %s275 = smul.addr %s274, 56
        %s276 = scalar_lea.vmem [#allocation2], %s275
        %p277 = pneg %p45
        %p278 = pneg %p42
        %p279 = pneg %p66
        %p280 = pneg %p63
        %p281 = pneg %p87
        %p282 = pneg %p84
        %p283 = pneg %p108
        %p284 = pneg %p105
        %p285 = pneg %p129
        %p286 = pneg %p126
        %p287 = pneg %p155
        %p288 = pneg %p152
        %s289 = sand.u32 %s142, 1
        %s290 = scalar_lea.sflag [#allocation4], %s289
        %s291 = sand.u32 %s142, 1
        %s292 = smul.addr %s291, 16
        %s293 = scalar_lea.vmem [#allocation10], %s292
        %s294 = smul.u32 2, %s24
        %s295 = smul.u32 2, %s24
        %v297 = vld [vmem:[%s251] sm:$0xff]
        %v298 = vld [vmem:[%s251 + $0x8] sm:$0xff]
        %v299 = vld [vmem:[%s251 + $0x10] sm:$0xff]
        %v300 = vld [vmem:[%s251 + $0x18] sm:$0xf]
        %v301 = vld [vmem:[%s251 + $0x1c] sm:$0xff]
        %v302 = vld [vmem:[%s251 + $0x24] sm:$0xff]
        %v303 = vld [vmem:[%s251 + $0x2c] sm:$0xff]
        %v304 = vld [vmem:[%s251 + $0x34] sm:$0xf]
        %v305 = vld [vmem:[#allocation5] sm:$0xff]
        %v306 = vld [vmem:[#allocation5 + $0x8] sm:$0xff]
        %v307 = vld [vmem:[#allocation5 + $0x10] sm:$0xff]
        %v308 = vld [vmem:[#allocation5 + $0x18] sm:$0xff]
        %v309 = vld [vmem:[#allocation5 + $0x20] sm:$0xff]
        %v310 = vld [vmem:[#allocation5 + $0x28] sm:$0xff]
        %v311 = vld [vmem:[#allocation5 + $0x30] sm:$0xff]
        %v312 = vld [vmem:[#allocation5 + $0x38] sm:$0xff]
        %v313 = vld [vmem:[#allocation5 + $0x40] sm:$0xff]
        %v314 = vld [vmem:[#allocation5 + $0x48] sm:$0xff]
        %v315 = vld [vmem:[#allocation5 + $0x50] sm:$0xff]
        %v316 = vld [vmem:[#allocation5 + $0x58] sm:$0xff]
        %v317 = vld [vmem:[#allocation5 + $0x60] sm:$0xff]
        %v318 = vld [vmem:[#allocation5 + $0x68] sm:$0xff]
        %v319 = vld [vmem:[#allocation5 + $0x70] sm:$0xff]
        %v320 = vld [vmem:[#allocation5 + $0x78] sm:$0xff]
        %v321 = vld [vmem:[#allocation5 + $0x80] sm:$0xff]
        %v322 = vld [vmem:[#allocation5 + $0x88] sm:$0xff]
        %v323 = vld [vmem:[#allocation5 + $0x90] sm:$0xff]
        %v324 = vld [vmem:[#allocation5 + $0x98] sm:$0xff]
        %v325 = vld [vmem:[#allocation5 + $0xa0] sm:$0xff]
        %v326 = vld [vmem:[#allocation5 + $0xa8] sm:$0xff]
        %v327 = vld [vmem:[#allocation5 + $0xb0] sm:$0xff]
        %v328 = vld [vmem:[#allocation5 + $0xb8] sm:$0xff]
        %v329 = vld [vmem:[#allocation5 + $0xc0] sm:$0xff]
        %v330 = vld [vmem:[#allocation5 + $0xc8] sm:$0xff]
        %v331 = vld [vmem:[#allocation5 + $0xd0] sm:$0xff]
        %v332 = vld [vmem:[#allocation5 + $0xd8] sm:$0xff]
        %v333 = vld [vmem:[#allocation5 + $0xe0] sm:$0xff]
        %v334 = vld [vmem:[#allocation5 + $0xe8] sm:$0xff]
        %v335 = vld [vmem:[#allocation5 + $0xf0] sm:$0xff]
        %v336 = vld [vmem:[#allocation5 + $0xf8] sm:$0xff]
        %v337 = vld [vmem:[#allocation5 + $0x100] sm:$0xff]
        %v338 = vld [vmem:[#allocation5 + $0x108] sm:$0xff]
        %v339 = vld [vmem:[#allocation5 + $0x110] sm:$0xff]
        %v340 = vld [vmem:[#allocation5 + $0x118] sm:$0xff]
        %v341 = vld [vmem:[#allocation5 + $0x120] sm:$0xff]
        %v342 = vld [vmem:[#allocation5 + $0x128] sm:$0xff]
        %v343 = vld [vmem:[#allocation5 + $0x130] sm:$0xff]
        %v344 = vld [vmem:[#allocation5 + $0x138] sm:$0xff]
        %v345 = vld [vmem:[#allocation5 + $0x140] sm:$0xff]
        %v346 = vld [vmem:[#allocation5 + $0x148] sm:$0xff]
        %v347 = vld [vmem:[#allocation5 + $0x150] sm:$0xff]
        %v348 = vld [vmem:[#allocation5 + $0x158] sm:$0xff]
        %v349 = vld [vmem:[#allocation5 + $0x160] sm:$0xff]
        %v350 = vld [vmem:[#allocation5 + $0x168] sm:$0xff]
        %v351 = vld [vmem:[#allocation5 + $0x170] sm:$0xff]
        %v352 = vld [vmem:[#allocation5 + $0x178] sm:$0xff]
        %v353 = vld [vmem:[#allocation5 + $0x180] sm:$0xff]
        %v354 = vld [vmem:[#allocation5 + $0x188] sm:$0xff]
        %v355 = vld [vmem:[#allocation5 + $0x190] sm:$0xff]
        %v356 = vld [vmem:[#allocation5 + $0x198] sm:$0xff]
        %v357 = vld [vmem:[#allocation5 + $0x1a0] sm:$0xff]
        %v358 = vld [vmem:[#allocation5 + $0x1a8] sm:$0xff]
        %v359 = vld [vmem:[#allocation5 + $0x1b0] sm:$0xff]
        %v360 = vld [vmem:[#allocation5 + $0x1b8] sm:$0xff]
        %v361 = vld [vmem:[#allocation5 + $0x1c0] sm:$0xff]
        %v362 = vld [vmem:[#allocation5 + $0x1c8] sm:$0xff]
        %v363 = vld [vmem:[#allocation5 + $0x1d0] sm:$0xff]
        %v364 = vld [vmem:[#allocation5 + $0x1d8] sm:$0xff]
        %v365 = vld [vmem:[#allocation5 + $0x1e0] sm:$0xff]
        %v366 = vld [vmem:[#allocation5 + $0x1e8] sm:$0xff]
        %v367 = vld [vmem:[#allocation5 + $0x1f0] sm:$0xff]
        %v368 = vld [vmem:[#allocation5 + $0x1f8] sm:$0xff]
        %v369 = vld [vmem:[#allocation5 + $0x200] sm:$0xff]
        %v370 = vld [vmem:[#allocation5 + $0x208] sm:$0xff]
        %v371 = vld [vmem:[#allocation5 + $0x210] sm:$0xff]
        %v372 = vld [vmem:[#allocation5 + $0x218] sm:$0xff]
        %v373 = vld [vmem:[#allocation5 + $0x220] sm:$0xff]
        %v374 = vld [vmem:[#allocation5 + $0x228] sm:$0xff]
        %v375 = vld [vmem:[#allocation5 + $0x230] sm:$0xff]
        %v376 = vld [vmem:[#allocation5 + $0x238] sm:$0xff]
        %v377 = vld [vmem:[#allocation5 + $0x240] sm:$0xff]
        %v378 = vld [vmem:[#allocation5 + $0x248] sm:$0xff]
        %v379 = vld [vmem:[#allocation5 + $0x250] sm:$0xff]
        %v380 = vld [vmem:[#allocation5 + $0x258] sm:$0xff]
        %v381 = vld [vmem:[#allocation5 + $0x260] sm:$0xff]
        %v382 = vld [vmem:[#allocation5 + $0x268] sm:$0xff]
        %v383 = vld [vmem:[#allocation5 + $0x270] sm:$0xff]
        %v384 = vld [vmem:[#allocation5 + $0x278] sm:$0xff]
        %v385 = vld [vmem:[#allocation5 + $0x280] sm:$0xff]
        %v386 = vld [vmem:[#allocation5 + $0x288] sm:$0xff]
        %v387 = vld [vmem:[#allocation5 + $0x290] sm:$0xff]
        %v388 = vld [vmem:[#allocation5 + $0x298] sm:$0xff]
        %v389 = vld [vmem:[#allocation5 + $0x2a0] sm:$0xff]
        %v390 = vld [vmem:[#allocation5 + $0x2a8] sm:$0xff]
        %v391 = vld [vmem:[#allocation5 + $0x2b0] sm:$0xff]
        %v392 = vld [vmem:[#allocation5 + $0x2b8] sm:$0xff]
        %v393 = vld [vmem:[#allocation5 + $0x2c0] sm:$0xff]
        %v394 = vld [vmem:[#allocation5 + $0x2c8] sm:$0xff]
        %v395 = vld [vmem:[#allocation5 + $0x2d0] sm:$0xff]
        %v396 = vld [vmem:[#allocation5 + $0x2d8] sm:$0xff]
        %v397 = vld [vmem:[#allocation5 + $0x2e0] sm:$0xff]
        %v398 = vld [vmem:[#allocation5 + $0x2e8] sm:$0xff]
        %v399 = vld [vmem:[#allocation5 + $0x2f0] sm:$0xff]
        %v400 = vld [vmem:[#allocation5 + $0x2f8] sm:$0xff]
        %v401 = vld [vmem:[#allocation5 + $0x300] sm:$0xff]
        %v402 = vld [vmem:[#allocation5 + $0x308] sm:$0xff]
        %v403 = vld [vmem:[#allocation7] sm:$0x3]
        %v405 = vperm.slane %v403, 0
        %v406 = vperm.slane %v403, 1
        %v417 = vunpack.c.l.b16 %v297
        %v418 = vunpack.c.h.b16 %v297
        %v419 = vunpack.c.l.b16 %v298
        %v420 = vunpack.c.h.b16 %v298
        %v421 = vunpack.c.l.b16 %v299
        %v422 = vunpack.c.h.b16 %v299
        %v423 = vunpack.c.l.b16 %v300
        %v424 = vunpack.c.l.b16 %v301
        %v425 = vunpack.c.h.b16 %v301
        %v426 = vunpack.c.l.b16 %v302
        %v427 = vunpack.c.h.b16 %v302
        %v428 = vunpack.c.l.b16 %v303
        %v429 = vunpack.c.h.b16 %v303
        %v430 = vunpack.c.l.b16 %v304
        %v431 = vpack.c.b16 %v424, %v417
        %v432 = vpack.c.b16 %v425, %v418
        %v433 = vpack.c.b16 %v426, %v419
        %v434 = vpack.c.b16 %v427, %v420
        %v435 = vpack.c.b16 %v428, %v421
        %v436 = vpack.c.b16 %v429, %v422
        %v437 = vpack.c.b16 %v430, %v423
        %v542 = vunpack.c.l.b16 %v305
        %v543 = vunpack.c.h.b16 %v305
        %v544 = vunpack.c.l.b16 %v306
        %v545 = vunpack.c.h.b16 %v306
        %v546 = vunpack.c.l.b16 %v307
        %v547 = vunpack.c.h.b16 %v307
        %v548 = vunpack.c.l.b16 %v308
        %v549 = vunpack.c.h.b16 %v308
        %v550 = vunpack.c.l.b16 %v309
        %v551 = vunpack.c.h.b16 %v309
        %v552 = vunpack.c.l.b16 %v310
        %v553 = vunpack.c.h.b16 %v310
        %v554 = vunpack.c.l.b16 %v311
        %v555 = vunpack.c.h.b16 %v311
        %v556 = vunpack.c.l.b16 %v312
        %v557 = vunpack.c.h.b16 %v312
        %v558 = vunpack.c.l.b16 %v313
        %v559 = vunpack.c.h.b16 %v313
        %v560 = vunpack.c.l.b16 %v314
        %v561 = vunpack.c.h.b16 %v314
        %v562 = vunpack.c.l.b16 %v315
        %v563 = vunpack.c.h.b16 %v315
        %v564 = vunpack.c.l.b16 %v316
        %v565 = vunpack.c.h.b16 %v316
        %v566 = vunpack.c.l.b16 %v317
        %v567 = vunpack.c.h.b16 %v317
        %v568 = vunpack.c.l.b16 %v318
        %v569 = vunpack.c.h.b16 %v318
        %v570 = vunpack.c.l.b16 %v319
        %v571 = vunpack.c.h.b16 %v319
        %v572 = vunpack.c.l.b16 %v320
        %v573 = vunpack.c.h.b16 %v320
        %v574 = vunpack.c.l.b16 %v321
        %v575 = vunpack.c.h.b16 %v321
        %v576 = vunpack.c.l.b16 %v322
        %v577 = vunpack.c.h.b16 %v322
        %v578 = vunpack.c.l.b16 %v323
        %v579 = vunpack.c.h.b16 %v323
        %v580 = vunpack.c.l.b16 %v324
        %v581 = vunpack.c.h.b16 %v324
        %v582 = vunpack.c.l.b16 %v325
        %v583 = vunpack.c.h.b16 %v325
        %v584 = vunpack.c.l.b16 %v326
        %v585 = vunpack.c.h.b16 %v326
        %v586 = vunpack.c.l.b16 %v327
        %v587 = vunpack.c.h.b16 %v327
        %v588 = vunpack.c.l.b16 %v328
        %v589 = vunpack.c.h.b16 %v328
        %v590 = vunpack.c.l.b16 %v329
        %v591 = vunpack.c.h.b16 %v329
        %v592 = vunpack.c.l.b16 %v330
        %v593 = vunpack.c.h.b16 %v330
        %v594 = vunpack.c.l.b16 %v331
        %v595 = vunpack.c.h.b16 %v331
        %v596 = vunpack.c.l.b16 %v332
        %v597 = vunpack.c.h.b16 %v332
        %v598 = vunpack.c.l.b16 %v333
        %v599 = vunpack.c.h.b16 %v333
        %v600 = vunpack.c.l.b16 %v334
        %v601 = vunpack.c.h.b16 %v334
        %v602 = vunpack.c.l.b16 %v335
        %v603 = vunpack.c.h.b16 %v335
        %v604 = vunpack.c.l.b16 %v336
        %v605 = vunpack.c.h.b16 %v336
        %v606 = vunpack.c.l.b16 %v337
        %v607 = vunpack.c.h.b16 %v337
        %v608 = vunpack.c.l.b16 %v338
        %v609 = vunpack.c.h.b16 %v338
        %v610 = vunpack.c.l.b16 %v339
        %v611 = vunpack.c.h.b16 %v339
        %v612 = vunpack.c.l.b16 %v340
        %v613 = vunpack.c.h.b16 %v340
        %v614 = vunpack.c.l.b16 %v341
        %v615 = vunpack.c.h.b16 %v341
        %v616 = vunpack.c.l.b16 %v342
        %v617 = vunpack.c.h.b16 %v342
        %v618 = vunpack.c.l.b16 %v343
        %v619 = vunpack.c.h.b16 %v343
        %v620 = vunpack.c.l.b16 %v344
        %v621 = vunpack.c.h.b16 %v344
        %v622 = vunpack.c.l.b16 %v345
        %v623 = vunpack.c.h.b16 %v345
        %v624 = vunpack.c.l.b16 %v346
        %v625 = vunpack.c.h.b16 %v346
        %v626 = vunpack.c.l.b16 %v347
        %v627 = vunpack.c.h.b16 %v347
        %v628 = vunpack.c.l.b16 %v348
        %v629 = vunpack.c.h.b16 %v348
        %v630 = vunpack.c.l.b16 %v349
        %v631 = vunpack.c.h.b16 %v349
        %v632 = vunpack.c.l.b16 %v350
        %v633 = vunpack.c.h.b16 %v350
        %v634 = vunpack.c.l.b16 %v351
        %v635 = vunpack.c.h.b16 %v351
        %v636 = vunpack.c.l.b16 %v352
        %v637 = vunpack.c.h.b16 %v352
        %v638 = vunpack.c.l.b16 %v353
        %v639 = vunpack.c.h.b16 %v353
        %v640 = vunpack.c.l.b16 %v354
        %v641 = vunpack.c.h.b16 %v354
        %v642 = vunpack.c.l.b16 %v355
        %v643 = vunpack.c.h.b16 %v355
        %v644 = vunpack.c.l.b16 %v356
        %v645 = vunpack.c.h.b16 %v356
        %v646 = vunpack.c.l.b16 %v357
        %v647 = vunpack.c.h.b16 %v357
        %v648 = vunpack.c.l.b16 %v358
        %v649 = vunpack.c.h.b16 %v358
        %v650 = vunpack.c.l.b16 %v359
        %v651 = vunpack.c.h.b16 %v359
        %v652 = vunpack.c.l.b16 %v360
        %v653 = vunpack.c.h.b16 %v360
        %v654 = vunpack.c.l.b16 %v361
        %v655 = vunpack.c.h.b16 %v361
        %v656 = vunpack.c.l.b16 %v362
        %v657 = vunpack.c.h.b16 %v362
        %v658 = vunpack.c.l.b16 %v363
        %v659 = vunpack.c.h.b16 %v363
        %v660 = vunpack.c.l.b16 %v364
        %v661 = vunpack.c.h.b16 %v364
        %v662 = vunpack.c.l.b16 %v365
        %v663 = vunpack.c.h.b16 %v365
        %v664 = vunpack.c.l.b16 %v366
        %v665 = vunpack.c.h.b16 %v366
        %v666 = vunpack.c.l.b16 %v367
        %v667 = vunpack.c.h.b16 %v367
        %v668 = vunpack.c.l.b16 %v368
        %v669 = vunpack.c.h.b16 %v368
        %v670 = vunpack.c.l.b16 %v369
        %v671 = vunpack.c.h.b16 %v369
        %v672 = vunpack.c.l.b16 %v370
        %v673 = vunpack.c.h.b16 %v370
        %v674 = vunpack.c.l.b16 %v371
        %v675 = vunpack.c.h.b16 %v371
        %v676 = vunpack.c.l.b16 %v372
        %v677 = vunpack.c.h.b16 %v372
        %v678 = vunpack.c.l.b16 %v373
        %v679 = vunpack.c.h.b16 %v373
        %v680 = vunpack.c.l.b16 %v374
        %v681 = vunpack.c.h.b16 %v374
        %v682 = vunpack.c.l.b16 %v375
        %v683 = vunpack.c.h.b16 %v375
        %v684 = vunpack.c.l.b16 %v376
        %v685 = vunpack.c.h.b16 %v376
        %v686 = vunpack.c.l.b16 %v377
        %v687 = vunpack.c.h.b16 %v377
        %v688 = vunpack.c.l.b16 %v378
        %v689 = vunpack.c.h.b16 %v378
        %v690 = vunpack.c.l.b16 %v379
        %v691 = vunpack.c.h.b16 %v379
        %v692 = vunpack.c.l.b16 %v380
        %v693 = vunpack.c.h.b16 %v380
        %v694 = vunpack.c.l.b16 %v381
        %v695 = vunpack.c.h.b16 %v381
        %v696 = vunpack.c.l.b16 %v382
        %v697 = vunpack.c.h.b16 %v382
        %v698 = vunpack.c.l.b16 %v383
        %v699 = vunpack.c.h.b16 %v383
        %v700 = vunpack.c.l.b16 %v384
        %v701 = vunpack.c.h.b16 %v384
        %v702 = vunpack.c.l.b16 %v385
        %v703 = vunpack.c.h.b16 %v385
        %v704 = vunpack.c.l.b16 %v386
        %v705 = vunpack.c.h.b16 %v386
        %v706 = vunpack.c.l.b16 %v387
        %v707 = vunpack.c.h.b16 %v387
        %v708 = vunpack.c.l.b16 %v388
        %v709 = vunpack.c.h.b16 %v388
        %v710 = vunpack.c.l.b16 %v389
        %v711 = vunpack.c.h.b16 %v389
        %v712 = vunpack.c.l.b16 %v390
        %v713 = vunpack.c.h.b16 %v390
        %v714 = vunpack.c.l.b16 %v391
        %v715 = vunpack.c.h.b16 %v391
        %v716 = vunpack.c.l.b16 %v392
        %v717 = vunpack.c.h.b16 %v392
        %v718 = vunpack.c.l.b16 %v393
        %v719 = vunpack.c.h.b16 %v393
        %v720 = vunpack.c.l.b16 %v394
        %v721 = vunpack.c.h.b16 %v394
        %v722 = vunpack.c.l.b16 %v395
        %v723 = vunpack.c.h.b16 %v395
        %v724 = vunpack.c.l.b16 %v396
        %v725 = vunpack.c.h.b16 %v396
        %v726 = vunpack.c.l.b16 %v397
        %v727 = vunpack.c.h.b16 %v397
        %v728 = vunpack.c.l.b16 %v398
        %v729 = vunpack.c.h.b16 %v398
        %v730 = vunpack.c.l.b16 %v399
        %v731 = vunpack.c.h.b16 %v399
        %v732 = vunpack.c.l.b16 %v400
        %v733 = vunpack.c.h.b16 %v400
        %v734 = vunpack.c.l.b16 %v401
        %v735 = vunpack.c.h.b16 %v401
        %v736 = vunpack.c.l.b16 %v402
        %v737 = vunpack.c.h.b16 %v402
        %v738 = vpack.c.b16 %v544, %v542
        %v739 = vpack.c.b16 %v545, %v543
        %v740 = vpack.c.b16 %v548, %v546
        %v741 = vpack.c.b16 %v549, %v547
        %v742 = vpack.c.b16 %v552, %v550
        %v743 = vpack.c.b16 %v553, %v551
        %v744 = vpack.c.b16 %v556, %v554
        %v745 = vpack.c.b16 %v557, %v555
        %v746 = vpack.c.b16 %v560, %v558
        %v747 = vpack.c.b16 %v561, %v559
        %v748 = vpack.c.b16 %v564, %v562
        %v749 = vpack.c.b16 %v565, %v563
        %v750 = vpack.c.b16 %v568, %v566
        %v751 = vpack.c.b16 %v569, %v567
        %v752 = vpack.c.b16 %v572, %v570
        %v753 = vpack.c.b16 %v573, %v571
        %v754 = vpack.c.b16 %v576, %v574
        %v755 = vpack.c.b16 %v577, %v575
        %v756 = vpack.c.b16 %v580, %v578
        %v757 = vpack.c.b16 %v581, %v579
        %v758 = vpack.c.b16 %v584, %v582
        %v759 = vpack.c.b16 %v585, %v583
        %v760 = vpack.c.b16 %v588, %v586
        %v761 = vpack.c.b16 %v589, %v587
        %v762 = vpack.c.b16 %v592, %v590
        %v763 = vpack.c.b16 %v593, %v591
        %v764 = vpack.c.b16 %v596, %v594
        %v765 = vpack.c.b16 %v597, %v595
        %v766 = vpack.c.b16 %v600, %v598
        %v767 = vpack.c.b16 %v601, %v599
        %v768 = vpack.c.b16 %v604, %v602
        %v769 = vpack.c.b16 %v605, %v603
        %v770 = vpack.c.b16 %v608, %v606
        %v771 = vpack.c.b16 %v609, %v607
        %v772 = vpack.c.b16 %v612, %v610
        %v773 = vpack.c.b16 %v613, %v611
        %v774 = vpack.c.b16 %v616, %v614
        %v775 = vpack.c.b16 %v617, %v615
        %v776 = vpack.c.b16 %v620, %v618
        %v777 = vpack.c.b16 %v621, %v619
        %v778 = vpack.c.b16 %v624, %v622
        %v779 = vpack.c.b16 %v625, %v623
        %v780 = vpack.c.b16 %v628, %v626
        %v781 = vpack.c.b16 %v629, %v627
        %v782 = vpack.c.b16 %v632, %v630
        %v783 = vpack.c.b16 %v633, %v631
        %v784 = vpack.c.b16 %v636, %v634
        %v785 = vpack.c.b16 %v637, %v635
        %v786 = vpack.c.b16 %v640, %v638
        %v787 = vpack.c.b16 %v641, %v639
        %v788 = vpack.c.b16 %v644, %v642
        %v789 = vpack.c.b16 %v645, %v643
        %v790 = vpack.c.b16 %v648, %v646
        %v791 = vpack.c.b16 %v649, %v647
        %v792 = vpack.c.b16 %v652, %v650
        %v793 = vpack.c.b16 %v653, %v651
        %v794 = vpack.c.b16 %v656, %v654
        %v795 = vpack.c.b16 %v657, %v655
        %v796 = vpack.c.b16 %v660, %v658
        %v797 = vpack.c.b16 %v661, %v659
        %v798 = vpack.c.b16 %v664, %v662
        %v799 = vpack.c.b16 %v665, %v663
        %v800 = vpack.c.b16 %v668, %v666
        %v801 = vpack.c.b16 %v669, %v667
        %v802 = vpack.c.b16 %v672, %v670
        %v803 = vpack.c.b16 %v673, %v671
        %v804 = vpack.c.b16 %v676, %v674
        %v805 = vpack.c.b16 %v677, %v675
        %v806 = vpack.c.b16 %v680, %v678
        %v807 = vpack.c.b16 %v681, %v679
        %v808 = vpack.c.b16 %v684, %v682
        %v809 = vpack.c.b16 %v685, %v683
        %v810 = vpack.c.b16 %v688, %v686
        %v811 = vpack.c.b16 %v689, %v687
        %v812 = vpack.c.b16 %v692, %v690
        %v813 = vpack.c.b16 %v693, %v691
        %v814 = vpack.c.b16 %v696, %v694
        %v815 = vpack.c.b16 %v697, %v695
        %v816 = vpack.c.b16 %v700, %v698
        %v817 = vpack.c.b16 %v701, %v699
        %v818 = vpack.c.b16 %v704, %v702
        %v819 = vpack.c.b16 %v705, %v703
        %v820 = vpack.c.b16 %v708, %v706
        %v821 = vpack.c.b16 %v709, %v707
        %v822 = vpack.c.b16 %v712, %v710
        %v823 = vpack.c.b16 %v713, %v711
        %v824 = vpack.c.b16 %v716, %v714
        %v825 = vpack.c.b16 %v717, %v715
        %v826 = vpack.c.b16 %v720, %v718
        %v827 = vpack.c.b16 %v721, %v719
        %v828 = vpack.c.b16 %v724, %v722
        %v829 = vpack.c.b16 %v725, %v723
        %v830 = vpack.c.b16 %v728, %v726
        %v831 = vpack.c.b16 %v729, %v727
        %v832 = vpack.c.b16 %v732, %v730
        %v833 = vpack.c.b16 %v733, %v731
        %v834 = vpack.c.b16 %v736, %v734
        %v835 = vpack.c.b16 %v737, %v735
        %vm934 = vcmask 130048
        %v936 = vsel %vm934, %v437, 0
        %938 = vmatpush.bf16.msra.mxu0 %v752
        %939 = vmatpush.bf16.msra.mxu0 %v750
        %940 = vmatpush.bf16.msra.mxu0 %v748
        %941 = vmatpush.bf16.msra.mxu0 %v746
        %942 = vmatpush.bf16.msra.mxu0 %v744
        %943 = vmatpush.bf16.msra.mxu0 %v742
        %944 = vmatpush.bf16.msra.mxu0 %v740
        %945 = vmatpush.bf16.msra.mxu0 %v738
        %946 = vmatmul.bf16.gmra.mxu0 %v431
        %v947 = vpop.f32.mrf.mxu0
        %v948 = vadd.f32 %v405, %v947
        %v949 = vpop.f32.mrf.mxu0
        %v950 = vadd.f32 %v405, %v949
        %951 = vdwg.mxu0
        %952 = vmatpush.bf16.msra.mxu0 %v768
        %953 = vmatpush.bf16.msra.mxu0 %v766
        %954 = vmatpush.bf16.msra.mxu0 %v764
        %955 = vmatpush.bf16.msra.mxu0 %v762
        %956 = vmatpush.bf16.msra.mxu0 %v760
        %957 = vmatpush.bf16.msra.mxu0 %v758
        %958 = vmatpush.bf16.msra.mxu0 %v756
        %959 = vmatpush.bf16.msra.mxu0 %v754
        %960 = vmatmul.bf16.gmra.mxu0 %v432
        %v961 = vpop.f32.mrf.mxu0
        %v962 = vadd.f32 %v948, %v961
        %v963 = vpop.f32.mrf.mxu0
        %v964 = vadd.f32 %v950, %v963
        %965 = vdwg.mxu0
        %966 = vmatpush.bf16.msra.mxu0 %v784
        %967 = vmatpush.bf16.msra.mxu0 %v782
        %968 = vmatpush.bf16.msra.mxu0 %v780
        %969 = vmatpush.bf16.msra.mxu0 %v778
        %970 = vmatpush.bf16.msra.mxu0 %v776
        %971 = vmatpush.bf16.msra.mxu0 %v774
        %972 = vmatpush.bf16.msra.mxu0 %v772
        %973 = vmatpush.bf16.msra.mxu0 %v770
        %974 = vmatmul.bf16.gmra.mxu0 %v433
        %v975 = vpop.f32.mrf.mxu0
        %v976 = vadd.f32 %v962, %v975
        %v977 = vpop.f32.mrf.mxu0
        %v978 = vadd.f32 %v964, %v977
        %979 = vdwg.mxu0
        %980 = vmatpush.bf16.msra.mxu0 %v800
        %981 = vmatpush.bf16.msra.mxu0 %v798
        %982 = vmatpush.bf16.msra.mxu0 %v796
        %983 = vmatpush.bf16.msra.mxu0 %v794
        %984 = vmatpush.bf16.msra.mxu0 %v792
        %985 = vmatpush.bf16.msra.mxu0 %v790
        %986 = vmatpush.bf16.msra.mxu0 %v788
        %987 = vmatpush.bf16.msra.mxu0 %v786
        %988 = vmatmul.bf16.gmra.mxu0 %v434
        %v989 = vpop.f32.mrf.mxu0
        %v990 = vadd.f32 %v976, %v989
        %v991 = vpop.f32.mrf.mxu0
        %v992 = vadd.f32 %v978, %v991
        %993 = vdwg.mxu0
        %994 = vmatpush.bf16.msra.mxu0 %v816
        %995 = vmatpush.bf16.msra.mxu0 %v814
        %996 = vmatpush.bf16.msra.mxu0 %v812
        %997 = vmatpush.bf16.msra.mxu0 %v810
        %998 = vmatpush.bf16.msra.mxu0 %v808
        %999 = vmatpush.bf16.msra.mxu0 %v806
        %1000 = vmatpush.bf16.msra.mxu0 %v804
        %1001 = vmatpush.bf16.msra.mxu0 %v802
        %1002 = vmatmul.bf16.gmra.mxu0 %v435
        %v1003 = vpop.f32.mrf.mxu0
        %v1004 = vadd.f32 %v990, %v1003
        %v1005 = vpop.f32.mrf.mxu0
        %v1006 = vadd.f32 %v992, %v1005
        %1007 = vdwg.mxu0
        %1008 = vmatpush.bf16.msra.mxu0 %v832
        %1009 = vmatpush.bf16.msra.mxu0 %v830
        %1010 = vmatpush.bf16.msra.mxu0 %v828
        %1011 = vmatpush.bf16.msra.mxu0 %v826
        %1012 = vmatpush.bf16.msra.mxu0 %v824
        %1013 = vmatpush.bf16.msra.mxu0 %v822
        %1014 = vmatpush.bf16.msra.mxu0 %v820
        %1015 = vmatpush.bf16.msra.mxu0 %v818
        %1016 = vmatmul.bf16.gmra.mxu0 %v436
        %v1017 = vpop.f32.mrf.mxu0
        %v1018 = vadd.f32 %v1004, %v1017
        %v1019 = vpop.f32.mrf.mxu0
        %v1020 = vadd.f32 %v1006, %v1019
        %1021 = vdwg.mxu0
        %1022 = vmatpush.bf16.msra.mxu0 0
        %1023 = vmatpush.bf16.msra.mxu0 0
        %1024 = vmatpush.bf16.msra.mxu0 0
        %1025 = vmatpush.bf16.msra.mxu0 0
        %1026 = vmatpush.bf16.msra.mxu0 0
        %1027 = vmatpush.bf16.msra.mxu0 0
        %1028 = vmatpush.bf16.msra.mxu0 0
        %1029 = vmatpush.bf16.msra.mxu0 %v834
        %1030 = vmatmul.bf16.gmra.mxu0 %v936
        %v1031 = vpop.f32.mrf.mxu0
        %v1032 = vadd.f32 %v1018, %v1031
        %v1033 = vpop.f32.mrf.mxu0
        %v1034 = vadd.f32 %v1020, %v1033
        %1035 = vdwg.mxu0
        %1036 = vmatpush.bf16.msra.mxu0 %v753
        %1037 = vmatpush.bf16.msra.mxu0 %v751
        %1038 = vmatpush.bf16.msra.mxu0 %v749
        %1039 = vmatpush.bf16.msra.mxu0 %v747
        %1040 = vmatpush.bf16.msra.mxu0 %v745
        %1041 = vmatpush.bf16.msra.mxu0 %v743
        %1042 = vmatpush.bf16.msra.mxu0 %v741
        %1043 = vmatpush.bf16.msra.mxu0 %v739
        %1044 = vmatmul.bf16.gmra.mxu0 %v431
        %v1045 = vpop.f32.mrf.mxu0
        %v1046 = vadd.f32 %v406, %v1045
        %v1047 = vpop.f32.mrf.mxu0
        %v1048 = vadd.f32 %v406, %v1047
        %1049 = vdwg.mxu0
        %1050 = vmatpush.bf16.msra.mxu0 %v769
        %1051 = vmatpush.bf16.msra.mxu0 %v767
        %1052 = vmatpush.bf16.msra.mxu0 %v765
        %1053 = vmatpush.bf16.msra.mxu0 %v763
        %1054 = vmatpush.bf16.msra.mxu0 %v761
        %1055 = vmatpush.bf16.msra.mxu0 %v759
        %1056 = vmatpush.bf16.msra.mxu0 %v757
        %1057 = vmatpush.bf16.msra.mxu0 %v755
        %1058 = vmatmul.bf16.gmra.mxu0 %v432
        %v1059 = vpop.f32.mrf.mxu0
        %v1060 = vadd.f32 %v1046, %v1059
        %v1061 = vpop.f32.mrf.mxu0
        %v1062 = vadd.f32 %v1048, %v1061
        %1063 = vdwg.mxu0
        %1064 = vmatpush.bf16.msra.mxu0 %v785
        %1065 = vmatpush.bf16.msra.mxu0 %v783
        %1066 = vmatpush.bf16.msra.mxu0 %v781
        %1067 = vmatpush.bf16.msra.mxu0 %v779
        %1068 = vmatpush.bf16.msra.mxu0 %v777
        %1069 = vmatpush.bf16.msra.mxu0 %v775
        %1070 = vmatpush.bf16.msra.mxu0 %v773
        %1071 = vmatpush.bf16.msra.mxu0 %v771
        %1072 = vmatmul.bf16.gmra.mxu0 %v433
        %v1073 = vpop.f32.mrf.mxu0
        %v1074 = vadd.f32 %v1060, %v1073
        %v1075 = vpop.f32.mrf.mxu0
        %v1076 = vadd.f32 %v1062, %v1075
        %1077 = vdwg.mxu0
        %1078 = vmatpush.bf16.msra.mxu0 %v801
        %1079 = vmatpush.bf16.msra.mxu0 %v799
        %1080 = vmatpush.bf16.msra.mxu0 %v797
        %1081 = vmatpush.bf16.msra.mxu0 %v795
        %1082 = vmatpush.bf16.msra.mxu0 %v793
        %1083 = vmatpush.bf16.msra.mxu0 %v791
        %1084 = vmatpush.bf16.msra.mxu0 %v789
        %1085 = vmatpush.bf16.msra.mxu0 %v787
        %1086 = vmatmul.bf16.gmra.mxu0 %v434
        %v1087 = vpop.f32.mrf.mxu0
        %v1088 = vadd.f32 %v1074, %v1087
        %v1089 = vpop.f32.mrf.mxu0
        %v1090 = vadd.f32 %v1076, %v1089
        %1091 = vdwg.mxu0
        %1092 = vmatpush.bf16.msra.mxu0 %v817
        %1093 = vmatpush.bf16.msra.mxu0 %v815
        %1094 = vmatpush.bf16.msra.mxu0 %v813
        %1095 = vmatpush.bf16.msra.mxu0 %v811
        %1096 = vmatpush.bf16.msra.mxu0 %v809
        %1097 = vmatpush.bf16.msra.mxu0 %v807
        %1098 = vmatpush.bf16.msra.mxu0 %v805
        %1099 = vmatpush.bf16.msra.mxu0 %v803
        %1100 = vmatmul.bf16.gmra.mxu0 %v435
        %v1101 = vpop.f32.mrf.mxu0
        %v1102 = vadd.f32 %v1088, %v1101
        %v1103 = vpop.f32.mrf.mxu0
        %v1104 = vadd.f32 %v1090, %v1103
        %1105 = vdwg.mxu0
        %1106 = vmatpush.bf16.msra.mxu0 %v833
        %1107 = vmatpush.bf16.msra.mxu0 %v831
        %1108 = vmatpush.bf16.msra.mxu0 %v829
        %1109 = vmatpush.bf16.msra.mxu0 %v827
        %1110 = vmatpush.bf16.msra.mxu0 %v825
        %1111 = vmatpush.bf16.msra.mxu0 %v823
        %1112 = vmatpush.bf16.msra.mxu0 %v821
        %1113 = vmatpush.bf16.msra.mxu0 %v819
        %1114 = vmatmul.bf16.gmra.mxu0 %v436
        %v1115 = vpop.f32.mrf.mxu0
        %v1116 = vadd.f32 %v1102, %v1115
        %v1117 = vpop.f32.mrf.mxu0
        %v1118 = vadd.f32 %v1104, %v1117
        %1119 = vdwg.mxu0
        %1120 = vmatpush.bf16.msra.mxu0 0
        %1121 = vmatpush.bf16.msra.mxu0 0
        %1122 = vmatpush.bf16.msra.mxu0 0
        %1123 = vmatpush.bf16.msra.mxu0 0
        %1124 = vmatpush.bf16.msra.mxu0 0
        %1125 = vmatpush.bf16.msra.mxu0 0
        %1126 = vmatpush.bf16.msra.mxu0 0
        %1127 = vmatpush.bf16.msra.mxu0 %v835
        %1128 = vmatmul.bf16.gmra.mxu0 %v936
        %v1129 = vpop.f32.mrf.mxu0
        %v1130 = vadd.f32 %v1116, %v1129
        %v1131 = vpop.f32.mrf.mxu0
        %v1132 = vadd.f32 %v1118, %v1131
        %1133 = vdwg.mxu0
        %v1134 = vmax.f32 %v1032, 0.0
        %v1135 = vmax.f32 %v1130, 0.0
        %v1136 = vmax.f32 %v1034, 0.0
        %v1137 = vmax.f32 %v1132, 0.0
        %v1138 = vpack.c.bf16 %v1136, %v1134
        %v1139 = vpack.c.bf16 %v1137, %v1135
        %v1140 = vld [vmem:[#allocation8] sm:$0xf]
        %v1141 = vld [vmem:[#allocation8 + $0x4] sm:$0xf]
        %v1142 = vld [vmem:[#allocation8 + $0x8] sm:$0xf]
        %v1143 = vld [vmem:[#allocation8 + $0xc] sm:$0xf]
        %v1144 = vld [vmem:[#allocation8 + $0x10] sm:$0xf]
        %v1145 = vld [vmem:[#allocation8 + $0x14] sm:$0xf]
        %v1146 = vld [vmem:[#allocation8 + $0x18] sm:$0xf]
        %v1147 = vld [vmem:[#allocation8 + $0x1c] sm:$0xf]
        %v1148 = vld [vmem:[#allocation8 + $0x20] sm:$0xf]
        %v1149 = vld [vmem:[#allocation8 + $0x24] sm:$0xf]
        %v1150 = vld [vmem:[#allocation8 + $0x28] sm:$0xf]
        %v1151 = vld [vmem:[#allocation8 + $0x2c] sm:$0xf]
        %v1152 = vld [vmem:[#allocation8 + $0x30] sm:$0xf]
        %v1153 = vld [vmem:[#allocation8 + $0x34] sm:$0xf]
        %v1154 = vld [vmem:[#allocation8 + $0x38] sm:$0xf]
        %v1155 = vld [vmem:[#allocation8 + $0x3c] sm:$0xf]
        %v1156 = vld [vmem:[#allocation8 + $0x40] sm:$0xf]
        %v1157 = vld [vmem:[#allocation8 + $0x44] sm:$0xf]
        %v1158 = vld [vmem:[#allocation8 + $0x48] sm:$0xf]
        %v1159 = vld [vmem:[#allocation8 + $0x4c] sm:$0xf]
        %v1160 = vld [vmem:[#allocation8 + $0x50] sm:$0xf]
        %v1161 = vld [vmem:[#allocation8 + $0x54] sm:$0xf]
        %v1162 = vld [vmem:[#allocation8 + $0x58] sm:$0xf]
        %v1163 = vld [vmem:[#allocation8 + $0x5c] sm:$0xf]
        %v1164 = vld [vmem:[#allocation8 + $0x60] sm:$0xf]
        %v1165 = vld [vmem:[#allocation8 + $0x64] sm:$0xf]
        %v1166 = vld [vmem:[#allocation8 + $0x68] sm:$0xf]
        %v1167 = vld [vmem:[#allocation8 + $0x6c] sm:$0xf]
        %v1168 = vld [vmem:[#allocation8 + $0x70] sm:$0xf]
        %v1169 = vld [vmem:[#allocation8 + $0x74] sm:$0xf]
        %v1170 = vld [vmem:[#allocation8 + $0x78] sm:$0xf]
        %v1171 = vld [vmem:[#allocation8 + $0x7c] sm:$0xf]
        %v1172 = vld [vmem:[%s4] sm:$0x1]
        %v1174 = vperm.slane %v1172, 0
        %v1208 = vunpack.c.l.b16 %v1140
        %v1209 = vunpack.c.l.b16 %v1141
        %v1210 = vunpack.c.l.b16 %v1142
        %v1211 = vunpack.c.l.b16 %v1143
        %v1212 = vunpack.c.l.b16 %v1144
        %v1213 = vunpack.c.l.b16 %v1145
        %v1214 = vunpack.c.l.b16 %v1146
        %v1215 = vunpack.c.l.b16 %v1147
        %v1216 = vunpack.c.l.b16 %v1148
        %v1217 = vunpack.c.l.b16 %v1149
        %v1218 = vunpack.c.l.b16 %v1150
        %v1219 = vunpack.c.l.b16 %v1151
        %v1220 = vunpack.c.l.b16 %v1152
        %v1221 = vunpack.c.l.b16 %v1153
        %v1222 = vunpack.c.l.b16 %v1154
        %v1223 = vunpack.c.l.b16 %v1155
        %v1224 = vunpack.c.l.b16 %v1156
        %v1225 = vunpack.c.l.b16 %v1157
        %v1226 = vunpack.c.l.b16 %v1158
        %v1227 = vunpack.c.l.b16 %v1159
        %v1228 = vunpack.c.l.b16 %v1160
        %v1229 = vunpack.c.l.b16 %v1161
        %v1230 = vunpack.c.l.b16 %v1162
        %v1231 = vunpack.c.l.b16 %v1163
        %v1232 = vunpack.c.l.b16 %v1164
        %v1233 = vunpack.c.l.b16 %v1165
        %v1234 = vunpack.c.l.b16 %v1166
        %v1235 = vunpack.c.l.b16 %v1167
        %v1236 = vunpack.c.l.b16 %v1168
        %v1237 = vunpack.c.l.b16 %v1169
        %v1238 = vunpack.c.l.b16 %v1170
        %v1239 = vunpack.c.l.b16 %v1171
        %v1240 = vpack.c.b16 %v1209, %v1208
        %v1241 = vpack.c.b16 %v1211, %v1210
        %v1242 = vpack.c.b16 %v1213, %v1212
        %v1243 = vpack.c.b16 %v1215, %v1214
        %v1244 = vpack.c.b16 %v1217, %v1216
        %v1245 = vpack.c.b16 %v1219, %v1218
        %v1246 = vpack.c.b16 %v1221, %v1220
        %v1247 = vpack.c.b16 %v1223, %v1222
        %v1248 = vpack.c.b16 %v1225, %v1224
        %v1249 = vpack.c.b16 %v1227, %v1226
        %v1250 = vpack.c.b16 %v1229, %v1228
        %v1251 = vpack.c.b16 %v1231, %v1230
        %v1252 = vpack.c.b16 %v1233, %v1232
        %v1253 = vpack.c.b16 %v1235, %v1234
        %v1254 = vpack.c.b16 %v1237, %v1236
        %v1255 = vpack.c.b16 %v1239, %v1238
        %1272 = vmatpush.bf16.msra.mxu0 %v1247
        %1273 = vmatpush.bf16.msra.mxu0 %v1246
        %1274 = vmatpush.bf16.msra.mxu0 %v1245
        %1275 = vmatpush.bf16.msra.mxu0 %v1244
        %1276 = vmatpush.bf16.msra.mxu0 %v1243
        %1277 = vmatpush.bf16.msra.mxu0 %v1242
        %1278 = vmatpush.bf16.msra.mxu0 %v1241
        %1279 = vmatpush.bf16.msra.mxu0 %v1240
        %1280 = vmatmul.bf16.gmra.mxu0 %v1138
        %v1281 = vpop.f32.mrf.mxu0
        %v1282 = vadd.f32 %v1174, %v1281
        %v1283 = vpop.f32.mrf.mxu0
        %v1284 = vadd.f32 %v1174, %v1283
        %1285 = vdwg.mxu0
        %1286 = vmatpush.bf16.msra.mxu0 %v1255
        %1287 = vmatpush.bf16.msra.mxu0 %v1254
        %1288 = vmatpush.bf16.msra.mxu0 %v1253
        %1289 = vmatpush.bf16.msra.mxu0 %v1252
        %1290 = vmatpush.bf16.msra.mxu0 %v1251
        %1291 = vmatpush.bf16.msra.mxu0 %v1250
        %1292 = vmatpush.bf16.msra.mxu0 %v1249
        %1293 = vmatpush.bf16.msra.mxu0 %v1248
        %1294 = vmatmul.bf16.gmra.mxu0 %v1139
        %v1295 = vpop.f32.mrf.mxu0
        %v1296 = vadd.f32 %v1282, %v1295
        %v1297 = vpop.f32.mrf.mxu0
        %v1298 = vadd.f32 %v1284, %v1297
        %1299 = vdwg.mxu0
        %1300 = vst [vmem:[%s293] sm:$0xff] %v1296
        %1301 = vst [vmem:[%s293 + $0x8] sm:$0xff] %v1298
        %s1302 = sand.u32 %s142, 1
        %s1303 = scalar_lea.sflag [#allocation4], %s1302
        %s1304 = sand.u32 %s142, 1
        %s1305 = smul.addr %s1304, 16
        %s1306 = scalar_lea.vmem [#allocation10], %s1305
        // Predicated region
        $region57: #{tpu_custom_call.1} parent=39 // pred_check
          %p1307 = pneg %p152
        $region58: #{tpu_custom_call.1} parent=39 // pred_check_branch
          %1309 = sbr.rel (%p1307) target = $region60
        $region59: #{tpu_custom_call.1} parent=39 // pred_region
          %s1310 = smul.u32 2, %s24
          %1312 = vsyncadd %s1303, 0
          %s1313 = smul.addr %s1310, 8
          %s1314 = scalar_lea.hbm %s5, %s1313
          %s1315 = sshll.u32 %s1306, 4
          %s1316 = int_to_ptr.vmem [resolvable:$true] %s1315
          %s1317 = sshll.u32 %s1314, 4
          %s1318 = int_to_ptr.hbm [resolvable:$true] %s1317
          %1323 = dma.vmem_to_hbm [thread:$0]  %s1316, 256, %s1318, %s1303, 128, 128, 8
        $region60: #{tpu_custom_call.1} parent=39 // pred_fallthru
          _
      $region40: #{tpu_custom_call.1} parent=5 // pred_fallthru
        _
      %p1324 = scmp.le.s32.totalorder 2, %s19
      // Predicated region
      $region61: #{tpu_custom_call.1} parent=5 // pred_check
        %p1325 = pneg %p1324
      $region62: #{tpu_custom_call.1} parent=5 // pred_check_branch
        %1327 = sbr.rel (%p1325) target = $region64
      $region63: #{tpu_custom_call.1} parent=5 // pred_region
        %s1328 = ssub.s32 %s19, 2
        // Predicated region
        $region65: #{tpu_custom_call.1} parent=63 // pred_check
          %p1329 = pneg %p158
        $region66: #{tpu_custom_call.1} parent=63 // pred_check_branch
          %1331 = sbr.rel (%p1329) target = $region68
        $region67: #{tpu_custom_call.1} parent=63 // pred_region
          %s1332 = sand.u32 %s143, 1
          %s1333 = scalar_lea.sflag [#allocation4], %s1332
          %s1334 = sand.u32 %s143, 1
          %s1335 = smul.addr %s1334, 16
          %s1336 = scalar_lea.vmem [#allocation10], %s1335
          %1338 = dma.done %s1333, 256
        $region68: #{tpu_custom_call.1} parent=63 // pred_fallthru
          _
      $region64: #{tpu_custom_call.1} parent=5 // pred_fallthru
        _
    $region6: #{tpu_custom_call.1} parent=1 // loop_footer
      %s23 = sadd.s32 1, %s19
    $region7: #{tpu_custom_call.1} parent=1 // loop_footer_branch
      %18 = sbr.rel target = $region3
    $region8: #{tpu_custom_call.1} parent=1 // loop_exit
      _
    %1339 = vsyncpa [#allocation3], 1
    %s1340 = scalar_lea.sflag [#allocation3], 1
    %1341 = vsyncpa %s1340, 1
    %1342 = vsyncpa [#allocation6], 1
    %1343 = vsyncpa [#allocation9], 1
    %1344 = vsyncpa [#allocation4], 1
    %s1345 = scalar_lea.sflag [#allocation4], 1
    %1346 = vsyncpa %s1345, 1

</llo_original>
